<compile_context>
chip_gen: v6e
topology: v6e:2x2x1
jax: 0.10.0
libtpu: 0.0.40
codegen_flags: <defaults>
</compile_context>

<pallas_src>
import jax
import jax.numpy as jnp
from jax.experimental import pallas as pl
from jax.experimental.pallas import tpu as pltpu

_LANES = 128
_SUBLANES = 8
_MAX_TILE_ROWS = 4096   # rows of 128 lanes per grid step -> ~4 MiB x + ~2 MiB out
_SPLIT_ROWS = 64        # batches >= 64*128 samples use >=2 grid steps (v7x megacore)


def mlp_kernel(w1_ref, b1_ref, w2_ref, b2_ref, x_ref, o_ref):
    # x_ref: (2, TR, 128) f32 VMEM slab, batch dense across sublanes AND lanes.
    # o_ref: (TR, 128) f32 VMEM slab (lane-dense, unmasked stores).
    # w1_ref: (4, 2), b1_ref: (4,), w2_ref: (4,), b2_ref: (1,)  -- scalars in SMEM.
    x0 = x_ref[0]   # (TR, 128)
    x1 = x_ref[1]   # (TR, 128)

    # fc2 accumulator seeded with its bias (single hoisted broadcast).
    z = jnp.full_like(x0, b2_ref[0])
    for j in range(4):  # hidden width = 4, fully unrolled broadcast-FMA chain on the VPU
        hj = jnp.maximum(w1_ref[j, 0] * x0 + w1_ref[j, 1] * x1 + b1_ref[j], 0.0)
        z = z + w2_ref[j] * hj

    # Sigmoid via a single EUP tanh: sigmoid(z) = 0.5 * tanh(z / 2) + 0.5.
    o_ref[...] = (0.5 * jnp.tanh(0.5 * z) + 0.5).astype(o_ref.dtype)


def _round_up(n, m):
    return ((n + m - 1) // m) * m


def simple_nnet_forward(x, w1, b1, w2, b2):
    """Forward pass of simpleNNet.

    x:  (B, 2) f32   (PyTorch layout)
    w1: (4, 2) f32   (PyTorch nn.Linear weight, (out, in))
    b1: (4,)   f32
    w2: (1, 4) f32
    b2: (1,)   f32
    returns (B, 1) f32
    """
    B = x.shape[0]

    # Choose rows-of-128-lanes tiling: big tiles to amortize per-step overhead, but
    # at least two grid steps for large batches so v7x's two TCs both get work.
    r_min = max(pl.cdiv(B, _LANES), 1)
    if r_min < _SPLIT_ROWS:
        tile_rows = _round_up(r_min, _SUBLANES)
    else:
        tile_rows = min(_MAX_TILE_ROWS, _round_up(pl.cdiv(r_min, 2), _SUBLANES))
    rows = _round_up(r_min, tile_rows)
    num_tiles = rows // tile_rows
    bp = rows * _LANES

    # Relayout (B, 2) -> (2, rows, 128): batch-dense slabs, zero padding for ragged tail.
    # Sample index s lives at [:, s // 128, s % 128].
    xt = jnp.pad(x, ((0, bp - B), (0, 0))).reshape(rows, _LANES, 2).transpose(2, 0, 1)

    smem = pl.BlockSpec(memory_space=pltpu.MemorySpace.SMEM)

    out = pl.pallas_call(
        mlp_kernel,
        out_shape=jax.ShapeDtypeStruct((rows, _LANES), jnp.float32),
        grid=(num_tiles,),
        in_specs=[
            smem,                                                    # w1 (4, 2)
            smem,                                                    # b1 (4,)
            smem,                                                    # w2 flattened (4,)
            smem,                                                    # b2 (1,)
            pl.BlockSpec((2, tile_rows, _LANES), lambda i: (0, i, 0)),  # x slab
        ],
        out_specs=pl.BlockSpec((tile_rows, _LANES), lambda i: (i, 0)),   # dense out slab
        compiler_params=pltpu.CompilerParams(
            dimension_semantics=("parallel",),
            vmem_limit_bytes=32 * 1024 * 1024,   # headroom on v5e's 16 MiB scoped default
        ),
    )(w1, b1, w2.reshape(4), b2, xt)

    # (rows, 128) -> (B, 1); padded samples are simply dropped.
    return out.reshape(-1)[:B].reshape(B, 1)


def init_params(key):
    # PyTorch nn.Linear default init: U(-1/sqrt(fan_in), 1/sqrt(fan_in)), weights (out, in).
    k1, k2, k3, k4 = jax.random.split(key, 4)
    bound1 = 1.0 / jnp.sqrt(2.0)
    bound2 = 1.0 / jnp.sqrt(4.0)
    w1 = jax.random.uniform(k1, (4, 2), jnp.float32, -bound1, bound1)
    b1 = jax.random.uniform(k2, (4,), jnp.float32, -bound1, bound1)
    w2 = jax.random.uniform(k3, (1, 4), jnp.float32, -bound2, bound2)
    b2 = jax.random.uniform(k4, (1,), jnp.float32, -bound2, bound2)
    return w1, b1, w2, b2


def reference_forward(x, w1, b1, w2, b2):
    h = jnp.maximum(x @ w1.T + b1, 0.0)
    return jax.nn.sigmoid(h @ w2.T + b2)


if __name__ == "__main__":
    key = jax.random.PRNGKey(0)
    kx, kp, kx2, kx3 = jax.random.split(key, 4)
    w1, b1, w2, b2 = init_params(kp)

    # Small batch (matches the toy module usage): single tile.
    B = 8
    x = jax.random.normal(kx, (B, 2), jnp.float32)
    out = jax.block_until_ready(simple_nnet_forward(x, w1, b1, w2, b2))
    ref = reference_forward(x, w1, b1, w2, b2)
    assert out.shape == (B, 1)
    assert jnp.allclose(out, ref, atol=1e-5, rtol=1e-5)

    # Ragged batch: single larger tile with padded tail lanes.
    B2 = 1300
    x2 = jax.random.normal(kx2, (B2, 2), jnp.float32)
    out2 = jax.block_until_ready(simple_nnet_forward(x2, w1, b1, w2, b2))
    ref2 = reference_forward(x2, w1, b1, w2, b2)
    assert out2.shape == (B2, 1)
    assert jnp.allclose(out2, ref2, atol=1e-5, rtol=1e-5)

    # Larger batch: exercises the multi-tile grid (>=2 "parallel" steps).
    B3 = 16500
    x3 = jax.random.normal(kx3, (B3, 2), jnp.float32)
    out3 = jax.block_until_ready(simple_nnet_forward(x3, w1, b1, w2, b2))
    ref3 = reference_forward(x3, w1, b1, w2, b2)
    assert out3.shape == (B3, 1)
    assert jnp.allclose(out3, ref3, atol=1e-5, rtol=1e-5)

    print("KERNEL_OK")
</pallas_src>

<mosaic_0001>
module attributes {stable_mosaic.version = 11 : i64} {
  func.func @mlp_kernel(%arg0: i32, %arg1: memref<4x2xf32, #tpu.memory_space<smem>>, %arg2: memref<4xf32, #tpu.memory_space<smem>>, %arg3: memref<4xf32, #tpu.memory_space<smem>>, %arg4: memref<1xf32, #tpu.memory_space<smem>>, %arg5: memref<2x8x128xf32, #tpu.memory_space<vmem>>, %arg6: memref<8x128xf32, #tpu.memory_space<vmem>>) attributes {dimension_semantics = [#tpu.dimension_semantics<parallel>], iteration_bounds = array<i64: 1>, scalar_prefetch = 0 : i64, scratch_operands = 0 : i64, tpu.core_type = #tpu.core_type<tc>, window_params = [{transform_indices = @transform_0, window_bounds = array<i64: 4, 2>}, {transform_indices = @transform_1, window_bounds = array<i64: 4>}, {transform_indices = @transform_2, window_bounds = array<i64: 4>}, {transform_indices = @transform_3, window_bounds = array<i64: 1>}, {transform_indices = @transform_4, window_bounds = array<i64: 2, 8, 128>}, {transform_indices = @transform_5, window_bounds = array<i64: 8, 128>}]} {
    %c0 = arith.constant 0 : index
    %c0_0 = arith.constant 0 : index
    %c0_1 = arith.constant 0 : index
    %0 = vector.load %arg5[%c0, %c0_0, %c0_1] : memref<2x8x128xf32, #tpu.memory_space<vmem>>, vector<1x8x128xf32>
    %1 = vector.shape_cast %0 : vector<1x8x128xf32> to vector<8x128xf32>
    %c1 = arith.constant 1 : index
    %c0_2 = arith.constant 0 : index
    %c0_3 = arith.constant 0 : index
    %2 = vector.load %arg5[%c1, %c0_2, %c0_3] : memref<2x8x128xf32, #tpu.memory_space<vmem>>, vector<1x8x128xf32>
    %3 = vector.shape_cast %2 : vector<1x8x128xf32> to vector<8x128xf32>
    %c0_4 = arith.constant 0 : index
    %4 = memref.load %arg4[%c0_4] : memref<1xf32, #tpu.memory_space<smem>>
    %5 = vector.broadcast %4 : f32 to vector<8x128xf32>
    %c0_5 = arith.constant 0 : index
    %c0_6 = arith.constant 0 : index
    %6 = memref.load %arg1[%c0_5, %c0_6] : memref<4x2xf32, #tpu.memory_space<smem>>
    %7 = vector.broadcast %6 : f32 to vector<8x128xf32>
    %8 = arith.mulf %7, %1 : vector<8x128xf32>
    %c0_7 = arith.constant 0 : index
    %c1_8 = arith.constant 1 : index
    %9 = memref.load %arg1[%c0_7, %c1_8] : memref<4x2xf32, #tpu.memory_space<smem>>
    %10 = vector.broadcast %9 : f32 to vector<8x128xf32>
    %11 = arith.mulf %10, %3 : vector<8x128xf32>
    %12 = arith.addf %8, %11 : vector<8x128xf32>
    %c0_9 = arith.constant 0 : index
    %13 = memref.load %arg2[%c0_9] : memref<4xf32, #tpu.memory_space<smem>>
    %14 = vector.broadcast %13 : f32 to vector<8x128xf32>
    %15 = arith.addf %12, %14 : vector<8x128xf32>
    %cst = arith.constant 0.000000e+00 : f32
    %16 = vector.broadcast %cst : f32 to vector<8x128xf32>
    %17 = arith.maximumf %15, %16 : vector<8x128xf32>
    %c0_10 = arith.constant 0 : index
    %18 = memref.load %arg3[%c0_10] : memref<4xf32, #tpu.memory_space<smem>>
    %19 = vector.broadcast %18 : f32 to vector<8x128xf32>
    %20 = arith.mulf %19, %17 : vector<8x128xf32>
    %21 = arith.addf %5, %20 : vector<8x128xf32>
    %c1_11 = arith.constant 1 : index
    %c0_12 = arith.constant 0 : index
    %22 = memref.load %arg1[%c1_11, %c0_12] : memref<4x2xf32, #tpu.memory_space<smem>>
    %23 = vector.broadcast %22 : f32 to vector<8x128xf32>
    %24 = arith.mulf %23, %1 : vector<8x128xf32>
    %c1_13 = arith.constant 1 : index
    %c1_14 = arith.constant 1 : index
    %25 = memref.load %arg1[%c1_13, %c1_14] : memref<4x2xf32, #tpu.memory_space<smem>>
    %26 = vector.broadcast %25 : f32 to vector<8x128xf32>
    %27 = arith.mulf %26, %3 : vector<8x128xf32>
    %28 = arith.addf %24, %27 : vector<8x128xf32>
    %c1_15 = arith.constant 1 : index
    %29 = memref.load %arg2[%c1_15] : memref<4xf32, #tpu.memory_space<smem>>
    %30 = vector.broadcast %29 : f32 to vector<8x128xf32>
    %31 = arith.addf %28, %30 : vector<8x128xf32>
    %cst_16 = arith.constant 0.000000e+00 : f32
    %32 = vector.broadcast %cst_16 : f32 to vector<8x128xf32>
    %33 = arith.maximumf %31, %32 : vector<8x128xf32>
    %c1_17 = arith.constant 1 : index
    %34 = memref.load %arg3[%c1_17] : memref<4xf32, #tpu.memory_space<smem>>
    %35 = vector.broadcast %34 : f32 to vector<8x128xf32>
    %36 = arith.mulf %35, %33 : vector<8x128xf32>
    %37 = arith.addf %21, %36 : vector<8x128xf32>
    %c2 = arith.constant 2 : index
    %c0_18 = arith.constant 0 : index
    %38 = memref.load %arg1[%c2, %c0_18] : memref<4x2xf32, #tpu.memory_space<smem>>
    %39 = vector.broadcast %38 : f32 to vector<8x128xf32>
    %40 = arith.mulf %39, %1 : vector<8x128xf32>
    %c2_19 = arith.constant 2 : index
    %c1_20 = arith.constant 1 : index
    %41 = memref.load %arg1[%c2_19, %c1_20] : memref<4x2xf32, #tpu.memory_space<smem>>
    %42 = vector.broadcast %41 : f32 to vector<8x128xf32>
    %43 = arith.mulf %42, %3 : vector<8x128xf32>
    %44 = arith.addf %40, %43 : vector<8x128xf32>
    %c2_21 = arith.constant 2 : index
    %45 = memref.load %arg2[%c2_21] : memref<4xf32, #tpu.memory_space<smem>>
    %46 = vector.broadcast %45 : f32 to vector<8x128xf32>
    %47 = arith.addf %44, %46 : vector<8x128xf32>
    %cst_22 = arith.constant 0.000000e+00 : f32
    %48 = vector.broadcast %cst_22 : f32 to vector<8x128xf32>
    %49 = arith.maximumf %47, %48 : vector<8x128xf32>
    %c2_23 = arith.constant 2 : index
    %50 = memref.load %arg3[%c2_23] : memref<4xf32, #tpu.memory_space<smem>>
    %51 = vector.broadcast %50 : f32 to vector<8x128xf32>
    %52 = arith.mulf %51, %49 : vector<8x128xf32>
    %53 = arith.addf %37, %52 : vector<8x128xf32>
    %c3 = arith.constant 3 : index
    %c0_24 = arith.constant 0 : index
    %54 = memref.load %arg1[%c3, %c0_24] : memref<4x2xf32, #tpu.memory_space<smem>>
    %55 = vector.broadcast %54 : f32 to vector<8x128xf32>
    %56 = arith.mulf %55, %1 : vector<8x128xf32>
    %c3_25 = arith.constant 3 : index
    %c1_26 = arith.constant 1 : index
    %57 = memref.load %arg1[%c3_25, %c1_26] : memref<4x2xf32, #tpu.memory_space<smem>>
    %58 = vector.broadcast %57 : f32 to vector<8x128xf32>
    %59 = arith.mulf %58, %3 : vector<8x128xf32>
    %60 = arith.addf %56, %59 : vector<8x128xf32>
    %c3_27 = arith.constant 3 : index
    %61 = memref.load %arg2[%c3_27] : memref<4xf32, #tpu.memory_space<smem>>
    %62 = vector.broadcast %61 : f32 to vector<8x128xf32>
    %63 = arith.addf %60, %62 : vector<8x128xf32>
    %cst_28 = arith.constant 0.000000e+00 : f32
    %64 = vector.broadcast %cst_28 : f32 to vector<8x128xf32>
    %65 = arith.maximumf %63, %64 : vector<8x128xf32>
    %c3_29 = arith.constant 3 : index
    %66 = memref.load %arg3[%c3_29] : memref<4xf32, #tpu.memory_space<smem>>
    %67 = vector.broadcast %66 : f32 to vector<8x128xf32>
    %68 = arith.mulf %67, %65 : vector<8x128xf32>
    %69 = arith.addf %53, %68 : vector<8x128xf32>
    %cst_30 = arith.constant 5.000000e-01 : f32
    %70 = vector.broadcast %cst_30 : f32 to vector<8x128xf32>
    %71 = arith.mulf %70, %69 : vector<8x128xf32>
    %72 = math.tanh %71 : vector<8x128xf32>
    %cst_31 = arith.constant 5.000000e-01 : f32
    %73 = vector.broadcast %cst_31 : f32 to vector<8x128xf32>
    %74 = arith.mulf %73, %72 : vector<8x128xf32>
    %cst_32 = arith.constant 5.000000e-01 : f32
    %75 = vector.broadcast %cst_32 : f32 to vector<8x128xf32>
    %76 = arith.addf %74, %75 : vector<8x128xf32>
    %c0_33 = arith.constant 0 : index
    %c0_34 = arith.constant 0 : index
    %77 = vector.load %arg6[%c0_33, %c0_34] : memref<8x128xf32, #tpu.memory_space<vmem>>, vector<8x128xf32>
    tpu.vector_store %arg6[%c0_33, %c0_34], %76 {strides = array<i32>} : memref<8x128xf32, #tpu.memory_space<vmem>>, vector<8x128xf32>,
    return
  }
  func.func @transform_0(%arg0: i32) -> (i32, i32) {
    %c0_i32 = arith.constant 0 : i32
    %c0_i32_0 = arith.constant 0 : i32
    %c0_i32_1 = arith.constant 0 : i32
    return %c0_i32, %c0_i32_0 : i32, i32
  }
  func.func @transform_1(%arg0: i32) -> i32 {
    %c0_i32 = arith.constant 0 : i32
    %c0_i32_0 = arith.constant 0 : i32
    return %c0_i32 : i32
  }
  func.func @transform_2(%arg0: i32) -> i32 {
    %c0_i32 = arith.constant 0 : i32
    %c0_i32_0 = arith.constant 0 : i32
    return %c0_i32 : i32
  }
  func.func @transform_3(%arg0: i32) -> i32 {
    %c0_i32 = arith.constant 0 : i32
    %c0_i32_0 = arith.constant 0 : i32
    return %c0_i32 : i32
  }
  func.func @transform_4(%arg0: i32) -> (i32, i32, i32) {
    %c0_i32 = arith.constant 0 : i32
    %c0_i32_0 = arith.constant 0 : i32
    %c0_i32_1 = arith.constant 0 : i32
    return %c0_i32, %arg0, %c0_i32_0 : i32, i32, i32
  }
  func.func @transform_5(%arg0: i32) -> (i32, i32) {
    %c0_i32 = arith.constant 0 : i32
    %c0_i32_0 = arith.constant 0 : i32
    return %arg0, %c0_i32 : i32, i32
  }
}

</mosaic_0001>

<llo_original>
// kernel: tpu_custom_call.1
$region0: #{tpu_custom_call.1}
  #allocation0 [shape = 'u32[]', space=smem, size = 0x4, offset = 0x4, fixed_abs, tag = 'smem constant byte address 0x4 - core index']
  #allocation1 [shape = 'u32[144,128]{1,0:T(1,128)}', space=vmem, size = 0x12000, scoped, tag = 'internal scratch']
  #allocation2 [shape = 'f32[1]{0:T(128)S(6)}', space=smem, size = 0x200, scoped, tag = 'scoped memory for tpu_custom_call.1']
  %s0 = inlined_call_operand.vmem [shape: f32[4,2], index: 0, kind: input, shape index: {}]
  %s1 = inlined_call_operand.vmem [shape: f32[4], index: 1, kind: input, shape index: {}]
  %s2 = inlined_call_operand.vmem [shape: f32[4], index: 2, kind: input, shape index: {}]
  %s3 = inlined_call_operand.<no memory space> [shape: f32[1], index: 3, kind: input, shape index: {}]
  %s4 = inlined_call_operand.hbm [shape: f32[2,8,128], index: 4, kind: input, shape index: {}]
  %s5 = inlined_call_operand.hbm [shape: f32[8,128], index: 5, kind: output, shape index: {}]
  %s6 = sld [smem:[#allocation0]]
  $region46: #{tpu_custom_call.1} parent=0
    _
  %s8 = ssub.s32 1, %s6
  %s9 = scalar_select 0, %s8, %s6
  %10 = sst [smem:[#allocation2]] %s3
  $region1: #{tpu_custom_call.1} parent=0
    #allocation3 [shape = 'u8[2048]{0}', space=smem, size = 0x800, scoped, tag = 'input window, operand 0, single buffered']
    #allocation4 [shape = 's32[1]{0}', space=sflag, size = 0x4, scoped, tag = 'scoped memory for tpu_custom_call.1']
    #allocation5 [shape = 's32[1]{0}', space=sflag, size = 0x4, scoped, tag = 'scoped memory for tpu_custom_call.1']
    #allocation6 [shape = 's32[1]{0}', space=sflag, size = 0x4, scoped, tag = 'scoped memory for tpu_custom_call.1']
    #allocation7 [shape = 'u8[512]{0}', space=smem, size = 0x200, scoped, tag = 'input window, operand 1, single buffered']
    #allocation8 [shape = 's32[1]{0}', space=sflag, size = 0x4, scoped, tag = 'scoped memory for tpu_custom_call.1']
    #allocation9 [shape = 'u8[512]{0}', space=smem, size = 0x200, scoped, tag = 'input window, operand 2, single buffered']
    #allocation10 [shape = 'u8[8192]{0}', space=vmem, size = 0x2000, scoped, tag = 'input window, operand 4, single buffered']
    #allocation11 [shape = 'u8[4096]{0}', space=vmem, size = 0x1000, scoped, tag = 'output window, operand 0, single buffered']
    %11 = vsyncpa [#allocation6], 0
    %12 = vsyncpa [#allocation8], 0
    %13 = vsyncpa [#allocation4], 0
    %14 = vsyncpa [#allocation5], 0
    // Predicated region
    $region2: #{tpu_custom_call.1} parent=1 // pred_check
      _
    $region3: #{tpu_custom_call.1} parent=1 // pred_check_branch
      %16 = sbr.rel (0) target = $region5
    $region4: #{tpu_custom_call.1} parent=1 // pred_region
      %s18 = ssub.s32 64, 64
      %19 = vsyncadd [#allocation6], %s18
      %s21 = sshll.u32 %s0, 4
      %s22 = int_to_ptr.vmem [resolvable:$true] %s21
      %24 = dma.vmem_to_smem %s22, 64, [#allocation3], [#allocation6]
    $region5: #{tpu_custom_call.1} parent=1 // pred_fallthru
      _
    // Predicated region
    $region6: #{tpu_custom_call.1} parent=1 // pred_check
      _
    $region7: #{tpu_custom_call.1} parent=1 // pred_check_branch
      %26 = sbr.rel (0) target = $region9
    $region8: #{tpu_custom_call.1} parent=1 // pred_region
      %s28 = ssub.s32 16, 16
      %29 = vsyncadd [#allocation8], %s28
      %s31 = sshll.u32 %s1, 4
      %s32 = int_to_ptr.vmem [resolvable:$true] %s31
      %34 = dma.vmem_to_smem %s32, 16, [#allocation7], [#allocation8]
    $region9: #{tpu_custom_call.1} parent=1 // pred_fallthru
      _
    // Predicated region
    $region10: #{tpu_custom_call.1} parent=1 // pred_check
      _
    $region11: #{tpu_custom_call.1} parent=1 // pred_check_branch
      %36 = sbr.rel (0) target = $region13
    $region12: #{tpu_custom_call.1} parent=1 // pred_region
      %s38 = ssub.s32 16, 16
      %39 = vsyncadd [#allocation8], %s38
      %s41 = sshll.u32 %s2, 4
      %s42 = int_to_ptr.vmem [resolvable:$true] %s41
      %44 = dma.vmem_to_smem %s42, 16, [#allocation9], [#allocation8]
    $region13: #{tpu_custom_call.1} parent=1 // pred_fallthru
      _
    // Predicated region
    $region14: #{tpu_custom_call.1} parent=1 // pred_check
      _
    $region15: #{tpu_custom_call.1} parent=1 // pred_check_branch
      %46 = sbr.rel (0) target = $region17
    $region16: #{tpu_custom_call.1} parent=1 // pred_region
      _
    $region17: #{tpu_custom_call.1} parent=1 // pred_fallthru
      _
    // Predicated region
    $region18: #{tpu_custom_call.1} parent=1 // pred_check
      _
    $region19: #{tpu_custom_call.1} parent=1 // pred_check_branch
      %48 = sbr.rel (0) target = $region21
    $region20: #{tpu_custom_call.1} parent=1 // pred_region
      %s50 = ssub.s32 256, 256
      %51 = vsyncadd [#allocation4], %s50
      %s52 = sshll.u32 [#allocation10], 4
      %s53 = int_to_ptr.vmem [resolvable:$true] %s52
      %58 = dma.hbm_to_vmem [thread:$0]  %s4, 256, %s53, [#allocation4], 128, 128, 8
    $region21: #{tpu_custom_call.1} parent=1 // pred_fallthru
      _
    // Predicated region
    $region22: #{tpu_custom_call.1} parent=1 // pred_check
      _
    $region23: #{tpu_custom_call.1} parent=1 // pred_check_branch
      %60 = sbr.rel (0) target = $region25
    $region24: #{tpu_custom_call.1} parent=1 // pred_region
      %61 = dma.done [#allocation6], 64
    $region25: #{tpu_custom_call.1} parent=1 // pred_fallthru
      _
    // Predicated region
    $region26: #{tpu_custom_call.1} parent=1 // pred_check
      _
    $region27: #{tpu_custom_call.1} parent=1 // pred_check_branch
      %63 = sbr.rel (0) target = $region29
    $region28: #{tpu_custom_call.1} parent=1 // pred_region
      %64 = dma.done [#allocation8], 16
    $region29: #{tpu_custom_call.1} parent=1 // pred_fallthru
      _
    // Predicated region
    $region30: #{tpu_custom_call.1} parent=1 // pred_check
      _
    $region31: #{tpu_custom_call.1} parent=1 // pred_check_branch
      %66 = sbr.rel (0) target = $region33
    $region32: #{tpu_custom_call.1} parent=1 // pred_region
      %67 = dma.done [#allocation8], 16
    $region33: #{tpu_custom_call.1} parent=1 // pred_fallthru
      _
    // Predicated region
    $region34: #{tpu_custom_call.1} parent=1 // pred_check
      _
    $region35: #{tpu_custom_call.1} parent=1 // pred_check_branch
      %69 = sbr.rel (0) target = $region37
    $region36: #{tpu_custom_call.1} parent=1 // pred_region
      %70 = dma.done [#allocation4], 256
    $region37: #{tpu_custom_call.1} parent=1 // pred_fallthru
      _
    %71 = sfence
    %v72 = vld [vmem:[#allocation10] sm:$0xff]
    %s73 = scalar_lea.vmem [#allocation10], 8
    %v74 = vld [vmem:[%s73] sm:$0xff]
    %s75 = sld [smem:[#allocation2]]
    %v76 = vstv %s75
    %s77 = sld [smem:[#allocation3]]
    %v78 = vstv %s77
    %v79 = vmul.f32 %v78, %v72
    %s80 = sld [smem:[#allocation3 + $0x1]]
    %v81 = vstv %s80
    %v82 = vmul.f32 %v81, %v74
    %v83 = vadd.f32 %v79, %v82
    %s84 = sld [smem:[#allocation7]]
    %v85 = vstv %s84
    %v86 = vadd.f32 %v83, %v85
    %v87 = vmax.f32 %v86, 0.0
    %s88 = sld [smem:[#allocation9]]
    %v89 = vstv %s88
    %v90 = vmul.f32 %v89, %v87
    %v91 = vadd.f32 %v76, %v90
    %s92 = sld [smem:[#allocation3 + $0x80]]
    %v93 = vstv %s92
    %v94 = vmul.f32 %v93, %v72
    %s95 = sld [smem:[#allocation3 + $0x81]]
    %v96 = vstv %s95
    %v97 = vmul.f32 %v96, %v74
    %v98 = vadd.f32 %v94, %v97
    %s99 = sld [smem:[#allocation7 + $0x1]]
    %v100 = vstv %s99
    %v101 = vadd.f32 %v98, %v100
    %v102 = vmax.f32 %v101, 0.0
    %s103 = sld [smem:[#allocation9 + $0x1]]
    %v104 = vstv %s103
    %v105 = vmul.f32 %v104, %v102
    %v106 = vadd.f32 %v91, %v105
    %s107 = sld [smem:[#allocation3 + $0x100]]
    %v108 = vstv %s107
    %v109 = vmul.f32 %v108, %v72
    %s110 = sld [smem:[#allocation3 + $0x101]]
    %v111 = vstv %s110
    %v112 = vmul.f32 %v111, %v74
    %v113 = vadd.f32 %v109, %v112
    %s114 = sld [smem:[#allocation7 + $0x2]]
    %v115 = vstv %s114
    %v116 = vadd.f32 %v113, %v115
    %v117 = vmax.f32 %v116, 0.0
    %s118 = sld [smem:[#allocation9 + $0x2]]
    %v119 = vstv %s118
    %v120 = vmul.f32 %v119, %v117
    %v121 = vadd.f32 %v106, %v120
    %s122 = sld [smem:[#allocation3 + $0x180]]
    %v123 = vstv %s122
    %v124 = vmul.f32 %v123, %v72
    %s125 = sld [smem:[#allocation3 + $0x181]]
    %v126 = vstv %s125
    %v127 = vmul.f32 %v126, %v74
    %v128 = vadd.f32 %v124, %v127
    %s129 = sld [smem:[#allocation7 + $0x3]]
    %v130 = vstv %s129
    %v131 = vadd.f32 %v128, %v130
    %v132 = vmax.f32 %v131, 0.0
    %s133 = sld [smem:[#allocation9 + $0x3]]
    %v134 = vstv %s133
    %v135 = vmul.f32 %v134, %v132
    %v136 = vadd.f32 %v121, %v135
    %v137 = vmul.f32 %v136, 0.5
    %v138 = vtanh.pop %v137
    %v139 = vmul.f32 %v138, 0.5
    %v140 = vadd.f32 %v139, 0.5
    %141 = vst [vmem:[#allocation11] sm:$0xff] %v140
    // Predicated region
    $region38: #{tpu_custom_call.1} parent=1 // pred_check
      _
    $region39: #{tpu_custom_call.1} parent=1 // pred_check_branch
      %143 = sbr.rel (0) target = $region41
    $region40: #{tpu_custom_call.1} parent=1 // pred_region
      %s145 = ssub.s32 128, 128
      %146 = vsyncadd [#allocation5], %s145
      %s148 = sshll.u32 [#allocation11], 4
      %s149 = int_to_ptr.vmem [resolvable:$true] %s148
      %151 = dma.vmem_to_hbm [thread:$0]  %s149, 128, %s5, [#allocation5]
    $region41: #{tpu_custom_call.1} parent=1 // pred_fallthru
      _
    // Predicated region
    $region42: #{tpu_custom_call.1} parent=1 // pred_check
      _
    $region43: #{tpu_custom_call.1} parent=1 // pred_check_branch
      %153 = sbr.rel (0) target = $region45
    $region44: #{tpu_custom_call.1} parent=1 // pred_region
      %154 = dma.done [#allocation5], 128
    $region45: #{tpu_custom_call.1} parent=1 // pred_fallthru
      _
    %155 = vsyncpa [#allocation4], 1
    %156 = vsyncpa [#allocation5], 1
    %157 = vsyncpa [#allocation6], 1
    %158 = vsyncpa [#allocation8], 1

</llo_original>
